<compile_context>
chip_gen: v5e
topology: v5e:2x2
jax: 0.10.0
libtpu: 0.0.40
codegen_flags: <defaults>
</compile_context>

<pallas_src>
from functools import partial

import jax
import jax.numpy as jnp
from jax import lax
from jax.experimental import pallas as pl
from jax.experimental.pallas import tpu as pltpu


def mhsa_kernel(x_ref, ang_ref, wqkv_ref, bqkv_ref, woh_ref, bo_ref, out_ref,
                *, num_heads, head_dim):
    """One grid step = one batch element.

    Operand layout (prepared in the wrapper, all exact algebraic rewrites):
      * Wqkv = [Wq | Wk | Wv] with per-channel scales folded in; 1/sqrt(hd) folded
        into the Wq/bq block.
      * Q/K column blocks are permuted into grouped-half layout:
        [all heads' even pair comps (E/2) | all heads' odd pair comps (E/2)].
      * Wo passed as (H, hd, E) so the output projection is accumulated per head.
      * ang_ref holds per-head-tiled RoPE angles of shape (S, E/2).
    """
    S = x_ref.shape[1]
    hd = head_dim
    hd2 = hd // 2
    E = num_heads * hd
    Eh = E // 2

    x = x_ref[0]                                          # (S, E) bf16

    # Fused Q/K/V projection: bf16 MXU operands, f32 accumulation. Scales folded.
    qkv = jnp.dot(x, wqkv_ref[...],
                  preferred_element_type=jnp.float32) + bqkv_ref[...]   # (S, 3E) f32
    Qa = qkv[:, :Eh]                                      # even pair components (all heads)
    Qb = qkv[:, Eh:E]                                     # odd pair components
    Ka = qkv[:, E:E + Eh]
    Kb = qkv[:, E + Eh:2 * E]
    Vb = qkv[:, 2 * E:].astype(jnp.bfloat16)              # (S, E), original column order

    # RoPE cos/sin from per-head-tiled angles, computed on the EUP (f32).
    ang = ang_ref[0]                                      # (S, E/2)
    c = jnp.cos(ang)
    s = jnp.sin(ang)

    # Rotation for ALL heads at once (full-width VPU math, no permutation matmul).
    Ra = Qa * c - Qb * s                                  # rotated "even" comps (S, E/2)
    Rb = Qb * c + Qa * s                                  # rotated "odd"  comps
    Ta = Ka * c - Kb * s
    Tb = Kb * c + Ka * s

    acc = jnp.zeros((S, E), jnp.float32)

    for h in range(num_heads):                            # static, num_heads is small
        sl = slice(h * hd2, (h + 1) * hd2)
        # per-head rotate-half operands (dot is invariant to this shared column order)
        qr = jnp.concatenate([Ra[:, sl], Rb[:, sl]], axis=-1).astype(jnp.bfloat16)
        kr = jnp.concatenate([Ta[:, sl], Tb[:, sl]], axis=-1).astype(jnp.bfloat16)

        # scores: contract head dim of both operands directly; 1/sqrt(hd) already in Wq
        sc = lax.dot_general(qr, kr, (((1,), (1,)), ((), ())),
                             preferred_element_type=jnp.float32)        # (S, S)
        sc = sc - jnp.max(sc, axis=-1, keepdims=True)
        p = jnp.exp(sc)
        p = p * pl.reciprocal(jnp.sum(p, axis=-1, keepdims=True), approx=True)

        ctx = jnp.dot(p.astype(jnp.bfloat16), Vb[:, h * hd:(h + 1) * hd],
                      preferred_element_type=jnp.float32)               # (S, hd)
        # fold the output projection into the head loop: (S,hd) @ (hd,E), lane-dense
        acc = acc + jnp.dot(ctx.astype(jnp.bfloat16), woh_ref[h],
                            preferred_element_type=jnp.float32)

    out_ref[0] = (acc + bo_ref[...]).astype(out_ref.dtype)


def mhsa_pallas(x, positions, params, num_heads):
    B, S, E = x.shape
    hd = E // num_heads
    hd2 = hd // 2
    Eh = E // 2
    f32, bf16 = jnp.float32, jnp.bfloat16
    inv_sqrt_d = 1.0 / float(hd) ** 0.5

    # ---- wrapper-side algebra (all exact rewrites) ----
    # grouped-half column permutation: [h0 evens, h1 evens, ... | h0 odds, h1 odds, ...]
    pair = jnp.arange(hd2)[None, :]
    head = jnp.arange(num_heads)[:, None]
    perm_a = (head * hd + 2 * pair).reshape(Eh)
    perm = jnp.concatenate([perm_a, perm_a + 1])

    Wq = ((params["Wq"] * params["qs"])[:, perm]) * inv_sqrt_d   # scale + 1/sqrt(d) fold
    bq = ((params["bq"] * params["qs"])[:, perm]) * inv_sqrt_d
    Wk = (params["Wk"] * params["ks"])[:, perm]
    bk = (params["bk"] * params["ks"])[:, perm]
    Wv = params["Wv"] * params["vs"]
    bv = params["bv"] * params["vs"]
    Wo = params["Wo"] * params["os"]
    bo = params["bo"] * params["os"]

    Wqkv = jnp.concatenate([Wq, Wk, Wv], axis=1).astype(bf16)    # (E, 3E)
    bqkv = jnp.concatenate([bq, bk, bv], axis=1).astype(f32)     # (1, 3E)
    WoH = Wo.reshape(num_heads, hd, E).astype(bf16)              # per-head out-proj rows
    bo = bo.astype(f32)

    # RoPE angles tiled over heads: (B, S, E/2); cos/sin computed in-kernel (EUP).
    ang = positions[:, :, None].astype(f32) * params["theta"][None, None, :]
    ang = jnp.tile(ang, (1, 1, num_heads))

    xb = x.astype(bf16)

    kernel = partial(mhsa_kernel, num_heads=num_heads, head_dim=hd)
    return pl.pallas_call(
        kernel,
        out_shape=jax.ShapeDtypeStruct((B, S, E), f32),
        grid_spec=pltpu.PrefetchScalarGridSpec(
            num_scalar_prefetch=0,
            grid=(B,),                                 # >=2 parallel steps for 2 TCs
            in_specs=[
                pl.BlockSpec((1, S, E), lambda b: (b, 0, 0)),          # x
                pl.BlockSpec((1, S, Eh), lambda b: (b, 0, 0)),         # angles
                pl.BlockSpec((E, 3 * E), lambda b: (0, 0)),            # Wqkv
                pl.BlockSpec((1, 3 * E), lambda b: (0, 0)),            # bqkv
                pl.BlockSpec((num_heads, hd, E), lambda b: (0, 0, 0)), # Wo per head
                pl.BlockSpec((1, E), lambda b: (0, 0)),                # bo
            ],
            out_specs=pl.BlockSpec((1, S, E), lambda b: (b, 0, 0))),
        compiler_params=pltpu.CompilerParams(
            dimension_semantics=("parallel",),
            vmem_limit_bytes=32 * 1024 * 1024),
    )(xb, ang, Wqkv, bqkv, WoH, bo)


def mhsa_ref(x, positions, params, num_heads):
    """Pure-JAX f32 reference mirroring the PyTorch forward."""
    B, S, E = x.shape
    hd = E // num_heads
    Q = (x @ params["Wq"] + params["bq"]) * params["qs"]
    K = (x @ params["Wk"] + params["bk"]) * params["ks"]
    V = (x @ params["Wv"] + params["bv"]) * params["vs"]

    def to_heads(T):
        return T.reshape(B, S, num_heads, hd).transpose(0, 2, 1, 3)   # (B,H,S,hd)

    Qh, Kh, Vh = to_heads(Q), to_heads(K), to_heads(V)
    angles = positions[:, :, None].astype(jnp.float32) * params["theta"][None, None, :]
    cos = jnp.cos(angles)[:, None]   # (B,1,S,hd/2)
    sin = jnp.sin(angles)[:, None]

    def rope(T):
        Tp = T.reshape(B, num_heads, S, hd // 2, 2)
        x0, x1 = Tp[..., 0], Tp[..., 1]
        r0 = x0 * cos - x1 * sin
        r1 = x0 * sin + x1 * cos
        return jnp.stack([r0, r1], axis=-1).reshape(B, num_heads, S, hd)

    Qr, Kr = rope(Qh), rope(Kh)
    scores = (Qr @ Kr.transpose(0, 1, 3, 2)) / jnp.sqrt(jnp.float32(hd))
    probs = jax.nn.softmax(scores, axis=-1)
    ctx = (probs @ Vh).transpose(0, 2, 1, 3).reshape(B, S, E)
    return (ctx @ params["Wo"] + params["bo"]) * params["os"]


if __name__ == "__main__":
    B, S, E, H = 2, 8, 32, 4
    hd = E // H

    key = jax.random.PRNGKey(0)
    keys = jax.random.split(key, 10)
    x = jax.random.normal(keys[0], (B, S, E), jnp.float32)
    positions = jnp.tile(jnp.arange(S, dtype=jnp.float32)[None, :], (B, 1))

    params = {
        "Wq": 0.1 * jax.random.normal(keys[1], (E, E), jnp.float32),
        "bq": 0.1 * jax.random.normal(keys[2], (1, E), jnp.float32),
        "Wk": 0.1 * jax.random.normal(keys[3], (E, E), jnp.float32),
        "bk": 0.1 * jax.random.normal(keys[4], (1, E), jnp.float32),
        "Wv": 0.1 * jax.random.normal(keys[5], (E, E), jnp.float32),
        "bv": 0.1 * jax.random.normal(keys[6], (1, E), jnp.float32),
        "Wo": 0.1 * jax.random.normal(keys[7], (E, E), jnp.float32),
        "bo": 0.1 * jax.random.normal(keys[8], (1, E), jnp.float32),
        # scaling vectors (ones at init, as in the module)
        "qs": jnp.ones((1, E), jnp.float32),
        "ks": jnp.ones((1, E), jnp.float32),
        "vs": jnp.ones((1, E), jnp.float32),
        "os": jnp.ones((1, E), jnp.float32),
        # compute_theta_vector(head_dim): theta_i = 10000^(-2i/head_dim)
        "theta": 1.0 / (10000.0 ** (2.0 * jnp.arange(hd // 2, dtype=jnp.float32) / hd)),
    }

    out = mhsa_pallas(x, positions, params, H)
    jax.block_until_ready(out)

    ref = mhsa_ref(x, positions, params, H)
    assert out.shape == (B, S, E)
    # tolerance is set by the bf16 matmul operands (f32 accumulation)
    err = float(jnp.max(jnp.abs(out - ref)))
    assert jnp.allclose(out, ref, atol=2e-2, rtol=2e-2), err

    print("KERNEL_OK")
</pallas_src>

<mosaic_0001>
module attributes {stable_mosaic.version = 11 : i64} {
  func.func @mhsa_kernel(%arg0: i32, %arg1: memref<1x8x32xbf16, #tpu.memory_space<vmem>>, %arg2: memref<1x8x16xf32, #tpu.memory_space<vmem>>, %arg3: memref<32x96xbf16, #tpu.memory_space<vmem>>, %arg4: memref<1x96xf32, #tpu.memory_space<vmem>>, %arg5: memref<4x8x32xbf16, #tpu.memory_space<vmem>>, %arg6: memref<1x32xf32, #tpu.memory_space<vmem>>, %arg7: memref<1x8x32xf32, #tpu.memory_space<vmem>>) attributes {dimension_semantics = [#tpu.dimension_semantics<parallel>], iteration_bounds = array<i64: 2>, scalar_prefetch = 0 : i64, scratch_operands = 0 : i64, tpu.core_type = #tpu.core_type<tc>, window_params = [{transform_indices = @transform_0, window_bounds = array<i64: 1, 8, 32>}, {transform_indices = @transform_1, window_bounds = array<i64: 1, 8, 16>}, {pipeline_mode = #tpu.pipeline_mode<synchronous>, transform_indices = @transform_2, window_bounds = array<i64: 32, 96>}, {pipeline_mode = #tpu.pipeline_mode<synchronous>, transform_indices = @transform_3, window_bounds = array<i64: 1, 96>}, {pipeline_mode = #tpu.pipeline_mode<synchronous>, transform_indices = @transform_4, window_bounds = array<i64: 4, 8, 32>}, {pipeline_mode = #tpu.pipeline_mode<synchronous>, transform_indices = @transform_5, window_bounds = array<i64: 1, 32>}, {transform_indices = @transform_6, window_bounds = array<i64: 1, 8, 32>}]} {
    %c0 = arith.constant 0 : index
    %c0_0 = arith.constant 0 : index
    %c0_1 = arith.constant 0 : index
    %0 = vector.load %arg1[%c0, %c0_0, %c0_1] : memref<1x8x32xbf16, #tpu.memory_space<vmem>>, vector<1x8x32xbf16>
    %1 = vector.shape_cast %0 : vector<1x8x32xbf16> to vector<8x32xbf16>
    %c0_2 = arith.constant 0 : index
    %c0_3 = arith.constant 0 : index
    %2 = vector.load %arg3[%c0_2, %c0_3] : memref<32x96xbf16, #tpu.memory_space<vmem>>, vector<32x96xbf16>
    %cst = arith.constant dense<0.000000e+00> : vector<8x96xf32>
    %3 = tpu.matmul %1, %2, %cst {dimension_numbers = #tpu.dot_dimension_numbers<[1], [0], [0], [1], [0, 0, 1, 1], [], []>} : vector<8x32xbf16>, vector<32x96xbf16>, vector<8x96xf32> -> vector<8x96xf32>
    %c0_4 = arith.constant 0 : index
    %c0_5 = arith.constant 0 : index
    %4 = vector.load %arg4[%c0_4, %c0_5] : memref<1x96xf32, #tpu.memory_space<vmem>>, vector<1x96xf32>
    %5 = vector.broadcast %4 : vector<1x96xf32> to vector<8x96xf32>
    %6 = arith.addf %3, %5 : vector<8x96xf32>
    %7 = vector.extract_strided_slice %6 {offsets = [0, 0], sizes = [8, 16], strides = [1, 1]} : vector<8x96xf32> to vector<8x16xf32>
    %8 = vector.extract_strided_slice %6 {offsets = [0, 16], sizes = [8, 16], strides = [1, 1]} : vector<8x96xf32> to vector<8x16xf32>
    %9 = vector.extract_strided_slice %6 {offsets = [0, 32], sizes = [8, 16], strides = [1, 1]} : vector<8x96xf32> to vector<8x16xf32>
    %10 = vector.extract_strided_slice %6 {offsets = [0, 48], sizes = [8, 16], strides = [1, 1]} : vector<8x96xf32> to vector<8x16xf32>
    %11 = vector.extract_strided_slice %6 {offsets = [0, 64], sizes = [8, 32], strides = [1, 1]} : vector<8x96xf32> to vector<8x32xf32>
    %12 = arith.truncf %11 : vector<8x32xf32> to vector<8x32xbf16>
    %c0_6 = arith.constant 0 : index
    %c0_7 = arith.constant 0 : index
    %c0_8 = arith.constant 0 : index
    %13 = vector.load %arg2[%c0_6, %c0_7, %c0_8] : memref<1x8x16xf32, #tpu.memory_space<vmem>>, vector<1x8x16xf32>
    %14 = vector.shape_cast %13 : vector<1x8x16xf32> to vector<8x16xf32>
    %15 = math.cos %14 : vector<8x16xf32>
    %16 = math.sin %14 : vector<8x16xf32>
    %17 = arith.mulf %7, %15 : vector<8x16xf32>
    %18 = arith.mulf %8, %16 : vector<8x16xf32>
    %19 = arith.subf %17, %18 : vector<8x16xf32>
    %20 = arith.mulf %8, %15 : vector<8x16xf32>
    %21 = arith.mulf %7, %16 : vector<8x16xf32>
    %22 = arith.addf %20, %21 : vector<8x16xf32>
    %23 = arith.mulf %9, %15 : vector<8x16xf32>
    %24 = arith.mulf %10, %16 : vector<8x16xf32>
    %25 = arith.subf %23, %24 : vector<8x16xf32>
    %26 = arith.mulf %10, %15 : vector<8x16xf32>
    %27 = arith.mulf %9, %16 : vector<8x16xf32>
    %28 = arith.addf %26, %27 : vector<8x16xf32>
    %cst_9 = arith.constant 0.000000e+00 : f32
    %29 = vector.broadcast %cst_9 : f32 to vector<8x32xf32>
    %30 = vector.extract_strided_slice %19 {offsets = [0, 0], sizes = [8, 4], strides = [1, 1]} : vector<8x16xf32> to vector<8x4xf32>
    %31 = vector.extract_strided_slice %22 {offsets = [0, 0], sizes = [8, 4], strides = [1, 1]} : vector<8x16xf32> to vector<8x4xf32>
    %32 = tpu.concatenate %30, %31 in 1 : vector<8x4xf32>, vector<8x4xf32> -> vector<8x8xf32>
    %33 = arith.truncf %32 : vector<8x8xf32> to vector<8x8xbf16>
    %34 = vector.extract_strided_slice %25 {offsets = [0, 0], sizes = [8, 4], strides = [1, 1]} : vector<8x16xf32> to vector<8x4xf32>
    %35 = vector.extract_strided_slice %28 {offsets = [0, 0], sizes = [8, 4], strides = [1, 1]} : vector<8x16xf32> to vector<8x4xf32>
    %36 = tpu.concatenate %34, %35 in 1 : vector<8x4xf32>, vector<8x4xf32> -> vector<8x8xf32>
    %37 = arith.truncf %36 : vector<8x8xf32> to vector<8x8xbf16>
    %cst_10 = arith.constant dense<0.000000e+00> : vector<8x8xf32>
    %38 = tpu.matmul %33, %37, %cst_10 {dimension_numbers = #tpu.dot_dimension_numbers<[1], [1], [0], [0], [0, 0, 1, 0], [], []>} : vector<8x8xbf16>, vector<8x8xbf16>, vector<8x8xf32> -> vector<8x8xf32>
    %cst_11 = arith.constant dense<0xFF800000> : vector<8xf32>
    %39 = vector.multi_reduction <maximumf>, %38, %cst_11 [1] : vector<8x8xf32> to vector<8xf32>
    %40 = vector.shape_cast %39 : vector<8xf32> to vector<8x1xf32>
    %41 = vector.broadcast %40 : vector<8x1xf32> to vector<8x8xf32>
    %42 = arith.subf %38, %41 : vector<8x8xf32>
    %43 = math.exp %42 : vector<8x8xf32>
    %cst_12 = arith.constant dense<0.000000e+00> : vector<8xf32>
    %44 = vector.multi_reduction <add>, %43, %cst_12 [1] : vector<8x8xf32> to vector<8xf32>
    %45 = vector.shape_cast %44 : vector<8xf32> to vector<8x1xf32>
    %46 = tpu.reciprocal %45 {approx = true} : vector<8x1xf32> -> vector<8x1xf32>
    %47 = vector.broadcast %46 : vector<8x1xf32> to vector<8x8xf32>
    %48 = arith.mulf %43, %47 : vector<8x8xf32>
    %49 = arith.truncf %48 : vector<8x8xf32> to vector<8x8xbf16>
    %50 = vector.extract_strided_slice %12 {offsets = [0, 0], sizes = [8, 8], strides = [1, 1]} : vector<8x32xbf16> to vector<8x8xbf16>
    %cst_13 = arith.constant dense<0.000000e+00> : vector<8x8xf32>
    %51 = tpu.matmul %49, %50, %cst_13 {dimension_numbers = #tpu.dot_dimension_numbers<[1], [0], [0], [1], [0, 0, 1, 1], [], []>} : vector<8x8xbf16>, vector<8x8xbf16>, vector<8x8xf32> -> vector<8x8xf32>
    %52 = arith.truncf %51 : vector<8x8xf32> to vector<8x8xbf16>
    %c0_14 = arith.constant 0 : index
    %c0_15 = arith.constant 0 : index
    %c0_16 = arith.constant 0 : index
    %53 = vector.load %arg5[%c0_14, %c0_15, %c0_16] : memref<4x8x32xbf16, #tpu.memory_space<vmem>>, vector<1x8x32xbf16>
    %54 = vector.shape_cast %53 : vector<1x8x32xbf16> to vector<8x32xbf16>
    %cst_17 = arith.constant dense<0.000000e+00> : vector<8x32xf32>
    %55 = tpu.matmul %52, %54, %cst_17 {dimension_numbers = #tpu.dot_dimension_numbers<[1], [0], [0], [1], [0, 0, 1, 1], [], []>} : vector<8x8xbf16>, vector<8x32xbf16>, vector<8x32xf32> -> vector<8x32xf32>
    %56 = arith.addf %29, %55 : vector<8x32xf32>
    %57 = vector.extract_strided_slice %19 {offsets = [0, 4], sizes = [8, 4], strides = [1, 1]} : vector<8x16xf32> to vector<8x4xf32>
    %58 = vector.extract_strided_slice %22 {offsets = [0, 4], sizes = [8, 4], strides = [1, 1]} : vector<8x16xf32> to vector<8x4xf32>
    %59 = tpu.concatenate %57, %58 in 1 : vector<8x4xf32>, vector<8x4xf32> -> vector<8x8xf32>
    %60 = arith.truncf %59 : vector<8x8xf32> to vector<8x8xbf16>
    %61 = vector.extract_strided_slice %25 {offsets = [0, 4], sizes = [8, 4], strides = [1, 1]} : vector<8x16xf32> to vector<8x4xf32>
    %62 = vector.extract_strided_slice %28 {offsets = [0, 4], sizes = [8, 4], strides = [1, 1]} : vector<8x16xf32> to vector<8x4xf32>
    %63 = tpu.concatenate %61, %62 in 1 : vector<8x4xf32>, vector<8x4xf32> -> vector<8x8xf32>
    %64 = arith.truncf %63 : vector<8x8xf32> to vector<8x8xbf16>
    %cst_18 = arith.constant dense<0.000000e+00> : vector<8x8xf32>
    %65 = tpu.matmul %60, %64, %cst_18 {dimension_numbers = #tpu.dot_dimension_numbers<[1], [1], [0], [0], [0, 0, 1, 0], [], []>} : vector<8x8xbf16>, vector<8x8xbf16>, vector<8x8xf32> -> vector<8x8xf32>
    %cst_19 = arith.constant dense<0xFF800000> : vector<8xf32>
    %66 = vector.multi_reduction <maximumf>, %65, %cst_19 [1] : vector<8x8xf32> to vector<8xf32>
    %67 = vector.shape_cast %66 : vector<8xf32> to vector<8x1xf32>
    %68 = vector.broadcast %67 : vector<8x1xf32> to vector<8x8xf32>
    %69 = arith.subf %65, %68 : vector<8x8xf32>
    %70 = math.exp %69 : vector<8x8xf32>
    %cst_20 = arith.constant dense<0.000000e+00> : vector<8xf32>
    %71 = vector.multi_reduction <add>, %70, %cst_20 [1] : vector<8x8xf32> to vector<8xf32>
    %72 = vector.shape_cast %71 : vector<8xf32> to vector<8x1xf32>
    %73 = tpu.reciprocal %72 {approx = true} : vector<8x1xf32> -> vector<8x1xf32>
    %74 = vector.broadcast %73 : vector<8x1xf32> to vector<8x8xf32>
    %75 = arith.mulf %70, %74 : vector<8x8xf32>
    %76 = arith.truncf %75 : vector<8x8xf32> to vector<8x8xbf16>
    %77 = vector.extract_strided_slice %12 {offsets = [0, 8], sizes = [8, 8], strides = [1, 1]} : vector<8x32xbf16> to vector<8x8xbf16>
    %cst_21 = arith.constant dense<0.000000e+00> : vector<8x8xf32>
    %78 = tpu.matmul %76, %77, %cst_21 {dimension_numbers = #tpu.dot_dimension_numbers<[1], [0], [0], [1], [0, 0, 1, 1], [], []>} : vector<8x8xbf16>, vector<8x8xbf16>, vector<8x8xf32> -> vector<8x8xf32>
    %79 = arith.truncf %78 : vector<8x8xf32> to vector<8x8xbf16>
    %c1 = arith.constant 1 : index
    %c0_22 = arith.constant 0 : index
    %c0_23 = arith.constant 0 : index
    %80 = vector.load %arg5[%c1, %c0_22, %c0_23] : memref<4x8x32xbf16, #tpu.memory_space<vmem>>, vector<1x8x32xbf16>
    %81 = vector.shape_cast %80 : vector<1x8x32xbf16> to vector<8x32xbf16>
    %cst_24 = arith.constant dense<0.000000e+00> : vector<8x32xf32>
    %82 = tpu.matmul %79, %81, %cst_24 {dimension_numbers = #tpu.dot_dimension_numbers<[1], [0], [0], [1], [0, 0, 1, 1], [], []>} : vector<8x8xbf16>, vector<8x32xbf16>, vector<8x32xf32> -> vector<8x32xf32>
    %83 = arith.addf %56, %82 : vector<8x32xf32>
    %84 = vector.extract_strided_slice %19 {offsets = [0, 8], sizes = [8, 4], strides = [1, 1]} : vector<8x16xf32> to vector<8x4xf32>
    %85 = vector.extract_strided_slice %22 {offsets = [0, 8], sizes = [8, 4], strides = [1, 1]} : vector<8x16xf32> to vector<8x4xf32>
    %86 = tpu.concatenate %84, %85 in 1 : vector<8x4xf32>, vector<8x4xf32> -> vector<8x8xf32>
    %87 = arith.truncf %86 : vector<8x8xf32> to vector<8x8xbf16>
    %88 = vector.extract_strided_slice %25 {offsets = [0, 8], sizes = [8, 4], strides = [1, 1]} : vector<8x16xf32> to vector<8x4xf32>
    %89 = vector.extract_strided_slice %28 {offsets = [0, 8], sizes = [8, 4], strides = [1, 1]} : vector<8x16xf32> to vector<8x4xf32>
    %90 = tpu.concatenate %88, %89 in 1 : vector<8x4xf32>, vector<8x4xf32> -> vector<8x8xf32>
    %91 = arith.truncf %90 : vector<8x8xf32> to vector<8x8xbf16>
    %cst_25 = arith.constant dense<0.000000e+00> : vector<8x8xf32>
    %92 = tpu.matmul %87, %91, %cst_25 {dimension_numbers = #tpu.dot_dimension_numbers<[1], [1], [0], [0], [0, 0, 1, 0], [], []>} : vector<8x8xbf16>, vector<8x8xbf16>, vector<8x8xf32> -> vector<8x8xf32>
    %cst_26 = arith.constant dense<0xFF800000> : vector<8xf32>
    %93 = vector.multi_reduction <maximumf>, %92, %cst_26 [1] : vector<8x8xf32> to vector<8xf32>
    %94 = vector.shape_cast %93 : vector<8xf32> to vector<8x1xf32>
    %95 = vector.broadcast %94 : vector<8x1xf32> to vector<8x8xf32>
    %96 = arith.subf %92, %95 : vector<8x8xf32>
    %97 = math.exp %96 : vector<8x8xf32>
    %cst_27 = arith.constant dense<0.000000e+00> : vector<8xf32>
    %98 = vector.multi_reduction <add>, %97, %cst_27 [1] : vector<8x8xf32> to vector<8xf32>
    %99 = vector.shape_cast %98 : vector<8xf32> to vector<8x1xf32>
    %100 = tpu.reciprocal %99 {approx = true} : vector<8x1xf32> -> vector<8x1xf32>
    %101 = vector.broadcast %100 : vector<8x1xf32> to vector<8x8xf32>
    %102 = arith.mulf %97, %101 : vector<8x8xf32>
    %103 = arith.truncf %102 : vector<8x8xf32> to vector<8x8xbf16>
    %104 = vector.extract_strided_slice %12 {offsets = [0, 16], sizes = [8, 8], strides = [1, 1]} : vector<8x32xbf16> to vector<8x8xbf16>
    %cst_28 = arith.constant dense<0.000000e+00> : vector<8x8xf32>
    %105 = tpu.matmul %103, %104, %cst_28 {dimension_numbers = #tpu.dot_dimension_numbers<[1], [0], [0], [1], [0, 0, 1, 1], [], []>} : vector<8x8xbf16>, vector<8x8xbf16>, vector<8x8xf32> -> vector<8x8xf32>
    %106 = arith.truncf %105 : vector<8x8xf32> to vector<8x8xbf16>
    %c2 = arith.constant 2 : index
    %c0_29 = arith.constant 0 : index
    %c0_30 = arith.constant 0 : index
    %107 = vector.load %arg5[%c2, %c0_29, %c0_30] : memref<4x8x32xbf16, #tpu.memory_space<vmem>>, vector<1x8x32xbf16>
    %108 = vector.shape_cast %107 : vector<1x8x32xbf16> to vector<8x32xbf16>
    %cst_31 = arith.constant dense<0.000000e+00> : vector<8x32xf32>
    %109 = tpu.matmul %106, %108, %cst_31 {dimension_numbers = #tpu.dot_dimension_numbers<[1], [0], [0], [1], [0, 0, 1, 1], [], []>} : vector<8x8xbf16>, vector<8x32xbf16>, vector<8x32xf32> -> vector<8x32xf32>
    %110 = arith.addf %83, %109 : vector<8x32xf32>
    %111 = vector.extract_strided_slice %19 {offsets = [0, 12], sizes = [8, 4], strides = [1, 1]} : vector<8x16xf32> to vector<8x4xf32>
    %112 = vector.extract_strided_slice %22 {offsets = [0, 12], sizes = [8, 4], strides = [1, 1]} : vector<8x16xf32> to vector<8x4xf32>
    %113 = tpu.concatenate %111, %112 in 1 : vector<8x4xf32>, vector<8x4xf32> -> vector<8x8xf32>
    %114 = arith.truncf %113 : vector<8x8xf32> to vector<8x8xbf16>
    %115 = vector.extract_strided_slice %25 {offsets = [0, 12], sizes = [8, 4], strides = [1, 1]} : vector<8x16xf32> to vector<8x4xf32>
    %116 = vector.extract_strided_slice %28 {offsets = [0, 12], sizes = [8, 4], strides = [1, 1]} : vector<8x16xf32> to vector<8x4xf32>
    %117 = tpu.concatenate %115, %116 in 1 : vector<8x4xf32>, vector<8x4xf32> -> vector<8x8xf32>
    %118 = arith.truncf %117 : vector<8x8xf32> to vector<8x8xbf16>
    %cst_32 = arith.constant dense<0.000000e+00> : vector<8x8xf32>
    %119 = tpu.matmul %114, %118, %cst_32 {dimension_numbers = #tpu.dot_dimension_numbers<[1], [1], [0], [0], [0, 0, 1, 0], [], []>} : vector<8x8xbf16>, vector<8x8xbf16>, vector<8x8xf32> -> vector<8x8xf32>
    %cst_33 = arith.constant dense<0xFF800000> : vector<8xf32>
    %120 = vector.multi_reduction <maximumf>, %119, %cst_33 [1] : vector<8x8xf32> to vector<8xf32>
    %121 = vector.shape_cast %120 : vector<8xf32> to vector<8x1xf32>
    %122 = vector.broadcast %121 : vector<8x1xf32> to vector<8x8xf32>
    %123 = arith.subf %119, %122 : vector<8x8xf32>
    %124 = math.exp %123 : vector<8x8xf32>
    %cst_34 = arith.constant dense<0.000000e+00> : vector<8xf32>
    %125 = vector.multi_reduction <add>, %124, %cst_34 [1] : vector<8x8xf32> to vector<8xf32>
    %126 = vector.shape_cast %125 : vector<8xf32> to vector<8x1xf32>
    %127 = tpu.reciprocal %126 {approx = true} : vector<8x1xf32> -> vector<8x1xf32>
    %128 = vector.broadcast %127 : vector<8x1xf32> to vector<8x8xf32>
    %129 = arith.mulf %124, %128 : vector<8x8xf32>
    %130 = arith.truncf %129 : vector<8x8xf32> to vector<8x8xbf16>
    %131 = vector.extract_strided_slice %12 {offsets = [0, 24], sizes = [8, 8], strides = [1, 1]} : vector<8x32xbf16> to vector<8x8xbf16>
    %cst_35 = arith.constant dense<0.000000e+00> : vector<8x8xf32>
    %132 = tpu.matmul %130, %131, %cst_35 {dimension_numbers = #tpu.dot_dimension_numbers<[1], [0], [0], [1], [0, 0, 1, 1], [], []>} : vector<8x8xbf16>, vector<8x8xbf16>, vector<8x8xf32> -> vector<8x8xf32>
    %133 = arith.truncf %132 : vector<8x8xf32> to vector<8x8xbf16>
    %c3 = arith.constant 3 : index
    %c0_36 = arith.constant 0 : index
    %c0_37 = arith.constant 0 : index
    %134 = vector.load %arg5[%c3, %c0_36, %c0_37] : memref<4x8x32xbf16, #tpu.memory_space<vmem>>, vector<1x8x32xbf16>
    %135 = vector.shape_cast %134 : vector<1x8x32xbf16> to vector<8x32xbf16>
    %cst_38 = arith.constant dense<0.000000e+00> : vector<8x32xf32>
    %136 = tpu.matmul %133, %135, %cst_38 {dimension_numbers = #tpu.dot_dimension_numbers<[1], [0], [0], [1], [0, 0, 1, 1], [], []>} : vector<8x8xbf16>, vector<8x32xbf16>, vector<8x32xf32> -> vector<8x32xf32>
    %137 = arith.addf %110, %136 : vector<8x32xf32>
    %c0_39 = arith.constant 0 : index
    %c0_40 = arith.constant 0 : index
    %138 = vector.load %arg6[%c0_39, %c0_40] : memref<1x32xf32, #tpu.memory_space<vmem>>, vector<1x32xf32>
    %139 = vector.broadcast %138 : vector<1x32xf32> to vector<8x32xf32>
    %140 = arith.addf %137, %139 : vector<8x32xf32>
    %c0_41 = arith.constant 0 : index
    %c0_42 = arith.constant 0 : index
    %c0_43 = arith.constant 0 : index
    %141 = vector.load %arg7[%c0_41, %c0_42, %c0_43] : memref<1x8x32xf32, #tpu.memory_space<vmem>>, vector<1x8x32xf32>
    %142 = vector.shape_cast %141 : vector<1x8x32xf32> to vector<8x32xf32>
    %143 = vector.shape_cast %140 : vector<8x32xf32> to vector<1x8x32xf32>
    tpu.vector_store %arg7[%c0_41, %c0_42, %c0_43], %143 {strides = array<i32>} : memref<1x8x32xf32, #tpu.memory_space<vmem>>, vector<1x8x32xf32>,
    return
  }
  func.func @transform_0(%arg0: i32) -> (i32, i32, i32) {
    %c0_i32 = arith.constant 0 : i32
    %c0_i32_0 = arith.constant 0 : i32
    %c0_i32_1 = arith.constant 0 : i32
    return %arg0, %c0_i32, %c0_i32_0 : i32, i32, i32
  }
  func.func @transform_1(%arg0: i32) -> (i32, i32, i32) {
    %c0_i32 = arith.constant 0 : i32
    %c0_i32_0 = arith.constant 0 : i32
    %c0_i32_1 = arith.constant 0 : i32
    return %arg0, %c0_i32, %c0_i32_0 : i32, i32, i32
  }
  func.func @transform_2(%arg0: i32) -> (i32, i32) {
    %c0_i32 = arith.constant 0 : i32
    %c0_i32_0 = arith.constant 0 : i32
    %c0_i32_1 = arith.constant 0 : i32
    return %c0_i32, %c0_i32_0 : i32, i32
  }
  func.func @transform_3(%arg0: i32) -> (i32, i32) {
    %c0_i32 = arith.constant 0 : i32
    %c0_i32_0 = arith.constant 0 : i32
    %c0_i32_1 = arith.constant 0 : i32
    return %c0_i32, %c0_i32_0 : i32, i32
  }
  func.func @transform_4(%arg0: i32) -> (i32, i32, i32) {
    %c0_i32 = arith.constant 0 : i32
    %c0_i32_0 = arith.constant 0 : i32
    %c0_i32_1 = arith.constant 0 : i32
    %c0_i32_2 = arith.constant 0 : i32
    return %c0_i32, %c0_i32_0, %c0_i32_1 : i32, i32, i32
  }
  func.func @transform_5(%arg0: i32) -> (i32, i32) {
    %c0_i32 = arith.constant 0 : i32
    %c0_i32_0 = arith.constant 0 : i32
    %c0_i32_1 = arith.constant 0 : i32
    return %c0_i32, %c0_i32_0 : i32, i32
  }
  func.func @transform_6(%arg0: i32) -> (i32, i32, i32) {
    %c0_i32 = arith.constant 0 : i32
    %c0_i32_0 = arith.constant 0 : i32
    %c0_i32_1 = arith.constant 0 : i32
    return %arg0, %c0_i32, %c0_i32_0 : i32, i32, i32
  }
}

</mosaic_0001>

<llo_original>
// kernel: tpu_custom_call.1
$region0: #{tpu_custom_call.1}
  #allocation0 [shape = 'u32[]', space=smem, size = 0x4, offset = 0x4, fixed_abs, tag = 'smem constant byte address 0x4 - core index']
  #allocation1 [shape = 'u32[72,128]{1,0:T(1,128)}', space=vmem, size = 0x9000, scoped, tag = 'internal scratch']
  %s0 = inlined_call_operand.hbm [shape: bf16[2,8,32], index: 0, kind: input, shape index: {}]
  %s1 = inlined_call_operand.hbm [shape: f32[2,8,16], index: 1, kind: input, shape index: {}]
  %s2 = inlined_call_operand.hbm [shape: bf16[32,96], index: 2, kind: input, shape index: {}]
  %s3 = inlined_call_operand.vmem [shape: f32[1,96], index: 3, kind: input, shape index: {}]
  %s4 = inlined_call_operand.hbm [shape: bf16[4,8,32], index: 4, kind: input, shape index: {}]
  %s5 = inlined_call_operand.vmem [shape: f32[1,32], index: 5, kind: input, shape index: {}]
  %s6 = inlined_call_operand.hbm [shape: f32[2,8,32], index: 6, kind: output, shape index: {}]
  %s7 = sld [smem:[#allocation0]]
  $region73: #{tpu_custom_call.1} parent=0
    _
  %s9 = ssub.s32 1, %s7
  %s10 = scalar_select 0, %s9, %s7
  $region1: #{tpu_custom_call.1} parent=0
    #allocation2 [shape = 'u8[4096]{0}', space=vmem, size = 0x1000, scoped, tag = 'input window, operand 0']
    #allocation3 [shape = 's32[2]{0}', space=sflag, size = 0x8, scoped, tag = 'scoped memory for tpu_custom_call.1']
    #allocation4 [shape = 's32[2]{0}', space=sflag, size = 0x8, scoped, tag = 'scoped memory for tpu_custom_call.1']
    #allocation5 [shape = 'u8[8192]{0}', space=vmem, size = 0x2000, scoped, tag = 'input window, operand 1']
    #allocation6 [shape = 's32[2]{0}', space=sflag, size = 0x8, scoped, tag = 'scoped memory for tpu_custom_call.1']
    #allocation7 [shape = 'u8[8192]{0}', space=vmem, size = 0x2000, scoped, tag = 'input window, operand 2, single buffered']
    #allocation8 [shape = 'u8[8192]{0}', space=vmem, size = 0x2000, scoped, tag = 'input window, operand 4, single buffered']
    #allocation9 [shape = 's32[1]{0}', space=sflag, size = 0x4, scoped, tag = 'scoped memory for tpu_custom_call.1']
    #allocation10 [shape = 'u8[8192]{0}', space=vmem, size = 0x2000, scoped, tag = 'output window, operand 0']
    %11 = vsyncpa [#allocation3], 0
    %s12 = scalar_lea.sflag [#allocation3], 1
    %13 = vsyncpa %s12, 0
    %14 = vsyncpa [#allocation6], 0
    %s15 = scalar_lea.sflag [#allocation6], 1
    %16 = vsyncpa %s15, 0
    %17 = vsyncpa [#allocation9], 0
    %18 = vsyncpa [#allocation4], 0
    %s19 = scalar_lea.sflag [#allocation4], 1
    %20 = vsyncpa %s19, 0
    loop: start=0, step=1, limit=4
    $region2: #{tpu_custom_call.1} parent=1 // loop_pre_header
      _
    $region3: #{tpu_custom_call.1} parent=1 // loop_header
      %s22 = sphi 0, %s26
      %p23 = scmp.ge.s32.totalorder %s22, 4
      %s32 = sphi 0, %s34
      %s35 = sphi 0, %s32
      %s36 = sphi 0, %s35
      %s52 = sphi 0, %s36
      %s58 = sphi 0, %s60
      %s61 = sphi 0, %s58
      %s62 = sphi 0, %s61
      %s78 = sphi 0, %s62
      %s82 = sphi 0, %s82
      %s84 = sphi 0, %s82
      %s85 = sphi 0, %s84
      %s99 = sphi 0, %s85
      %s103 = sphi 0, %s103
      %s105 = sphi 0, %s103
      %s106 = sphi 0, %s105
      %s120 = sphi 0, %s106
      %s124 = sphi 0, %s124
      %s126 = sphi 0, %s124
      %s127 = sphi 0, %s126
      %s141 = sphi 0, %s127
      %s145 = sphi 0, %s145
      %s147 = sphi 0, %s145
      %s148 = sphi 0, %s147
      %s162 = sphi 0, %s148
      %s168 = sphi 0, %s170
      %s171 = sphi 0, %s168
      %s172 = sphi 0, %s171
      %s188 = sphi 0, %s172
    $region4: #{tpu_custom_call.1} parent=1 // loop_header_branch
      %25 = sbr.rel (%p23) target = $region8
    $region5: #{tpu_custom_call.1} parent=1 // loop_body
      %s27 = ssub.s32 %s22, 1
      %s28 = ssub.s32 %s22, 2
      %s29 = sadd.s32 %s22, 1
      %s30 = ssub.s32 %s22, %s29
      %p31 = scmp.eq.s32.totalorder %s30, 0
      %s33 = sadd.s32 %s32, 1
      %s34 = scalar_select %p31, %s32, %s33
      %p37 = pneg %p31
      %p38 = scmp.eq.s32.totalorder %s22, 1
      %p39 = por %p37, %p38
      %p40 = scmp.ne.s32.totalorder %s32, %s35
      %p41 = scmp.eq.s32.totalorder %s22, 0
      %p42 = por %p40, %p41
      %p43 = scmp.ne.s32.totalorder %s32, %s35
      %p44 = scmp.eq.s32.totalorder %s27, 1
      %p45 = por %p43, %p44
      %p46 = scmp.ne.s32.totalorder %s35, %s36
      %p47 = scmp.eq.s32.totalorder %s27, 0
      %p48 = por %p46, %p47
      %p49 = scmp.ne.s32.totalorder %s35, %s36
      %p50 = scmp.eq.s32.totalorder %s28, 1
      %p51 = por %p49, %p50
      %p53 = scmp.ne.s32.totalorder %s36, %s52
      %p54 = scmp.eq.s32.totalorder %s28, 0
      %p55 = por %p53, %p54
      %s56 = ssub.s32 %s22, %s29
      %p57 = scmp.eq.s32.totalorder %s56, 0
      %s59 = sadd.s32 %s58, 1
      %s60 = scalar_select %p57, %s58, %s59
      %p63 = pneg %p57
      %p64 = scmp.eq.s32.totalorder %s22, 1
      %p65 = por %p63, %p64
      %p66 = scmp.ne.s32.totalorder %s58, %s61
      %p67 = scmp.eq.s32.totalorder %s22, 0
      %p68 = por %p66, %p67
      %p69 = scmp.ne.s32.totalorder %s58, %s61
      %p70 = scmp.eq.s32.totalorder %s27, 1
      %p71 = por %p69, %p70
      %p72 = scmp.ne.s32.totalorder %s61, %s62
      %p73 = scmp.eq.s32.totalorder %s27, 0
      %p74 = por %p72, %p73
      %p75 = scmp.ne.s32.totalorder %s61, %s62
      %p76 = scmp.eq.s32.totalorder %s28, 1
      %p77 = por %p75, %p76
      %p79 = scmp.ne.s32.totalorder %s62, %s78
      %p80 = scmp.eq.s32.totalorder %s28, 0
      %p81 = por %p79, %p80
      %s83 = sadd.s32 %s82, 1
      %p86 = scmp.eq.s32.totalorder %s22, 1
      %p87 = scmp.ne.s32.totalorder %s82, %s84
      %p88 = scmp.eq.s32.totalorder %s22, 0
      %p89 = por %p87, %p88
      %p90 = scmp.ne.s32.totalorder %s82, %s84
      %p91 = scmp.eq.s32.totalorder %s27, 1
      %p92 = por %p90, %p91
      %p93 = scmp.ne.s32.totalorder %s84, %s85
      %p94 = scmp.eq.s32.totalorder %s27, 0
      %p95 = por %p93, %p94
      %p96 = scmp.ne.s32.totalorder %s84, %s85
      %p97 = scmp.eq.s32.totalorder %s28, 1
      %p98 = por %p96, %p97
      %p100 = scmp.ne.s32.totalorder %s85, %s99
      %p101 = scmp.eq.s32.totalorder %s28, 0
      %p102 = por %p100, %p101
      %s104 = sadd.s32 %s103, 1
      %p107 = scmp.eq.s32.totalorder %s22, 1
      %p108 = scmp.ne.s32.totalorder %s103, %s105
      %p109 = scmp.eq.s32.totalorder %s22, 0
      %p110 = por %p108, %p109
      %p111 = scmp.ne.s32.totalorder %s103, %s105
      %p112 = scmp.eq.s32.totalorder %s27, 1
      %p113 = por %p111, %p112
      %p114 = scmp.ne.s32.totalorder %s105, %s106
      %p115 = scmp.eq.s32.totalorder %s27, 0
      %p116 = por %p114, %p115
      %p117 = scmp.ne.s32.totalorder %s105, %s106
      %p118 = scmp.eq.s32.totalorder %s28, 1
      %p119 = por %p117, %p118
      %p121 = scmp.ne.s32.totalorder %s106, %s120
      %p122 = scmp.eq.s32.totalorder %s28, 0
      %p123 = por %p121, %p122
      %s125 = sadd.s32 %s124, 1
      %p128 = scmp.eq.s32.totalorder %s22, 1
      %p129 = scmp.ne.s32.totalorder %s124, %s126
      %p130 = scmp.eq.s32.totalorder %s22, 0
      %p131 = por %p129, %p130
      %p132 = scmp.ne.s32.totalorder %s124, %s126
      %p133 = scmp.eq.s32.totalorder %s27, 1
      %p134 = por %p132, %p133
      %p135 = scmp.ne.s32.totalorder %s126, %s127
      %p136 = scmp.eq.s32.totalorder %s27, 0
      %p137 = por %p135, %p136
      %p138 = scmp.ne.s32.totalorder %s126, %s127
      %p139 = scmp.eq.s32.totalorder %s28, 1
      %p140 = por %p138, %p139
      %p142 = scmp.ne.s32.totalorder %s127, %s141
      %p143 = scmp.eq.s32.totalorder %s28, 0
      %p144 = por %p142, %p143
      %s146 = sadd.s32 %s145, 1
      %p149 = scmp.eq.s32.totalorder %s22, 1
      %p150 = scmp.ne.s32.totalorder %s145, %s147
      %p151 = scmp.eq.s32.totalorder %s22, 0
      %p152 = por %p150, %p151
      %p153 = scmp.ne.s32.totalorder %s145, %s147
      %p154 = scmp.eq.s32.totalorder %s27, 1
      %p155 = por %p153, %p154
      %p156 = scmp.ne.s32.totalorder %s147, %s148
      %p157 = scmp.eq.s32.totalorder %s27, 0
      %p158 = por %p156, %p157
      %p159 = scmp.ne.s32.totalorder %s147, %s148
      %p160 = scmp.eq.s32.totalorder %s28, 1
      %p161 = por %p159, %p160
      %p163 = scmp.ne.s32.totalorder %s148, %s162
      %p164 = scmp.eq.s32.totalorder %s28, 0
      %p165 = por %p163, %p164
      %s166 = ssub.s32 %s22, %s29
      %p167 = scmp.eq.s32.totalorder %s166, 0
      %s169 = sadd.s32 %s168, 1
      %s170 = scalar_select %p167, %s168, %s169
      %p173 = pneg %p167
      %p174 = scmp.eq.s32.totalorder %s22, 1
      %p175 = por %p173, %p174
      %p176 = scmp.ne.s32.totalorder %s168, %s171
      %p177 = scmp.eq.s32.totalorder %s22, 0
      %p178 = por %p176, %p177
      %p179 = scmp.ne.s32.totalorder %s168, %s171
      %p180 = scmp.eq.s32.totalorder %s27, 1
      %p181 = por %p179, %p180
      %p182 = scmp.ne.s32.totalorder %s171, %s172
      %p183 = scmp.eq.s32.totalorder %s27, 0
      %p184 = por %p182, %p183
      %p185 = scmp.ne.s32.totalorder %s171, %s172
      %p186 = scmp.eq.s32.totalorder %s28, 1
      %p187 = por %p185, %p186
      %p189 = scmp.ne.s32.totalorder %s172, %s188
      %p190 = scmp.eq.s32.totalorder %s28, 0
      %p191 = por %p189, %p190
      %p192 = scmp.le.s32.totalorder 1, %s22
      %p193 = scmp.lt.s32.totalorder %s22, 3
      %p194 = pnand %p192, %p193
      %p195 = pneg %p194
      // Predicated region
      $region9: #{tpu_custom_call.1} parent=5 // pred_check
        _
      $region10: #{tpu_custom_call.1} parent=5 // pred_check_branch
        %197 = sbr.rel (%p194) target = $region12
      $region11: #{tpu_custom_call.1} parent=5 // pred_region
        %s198 = ssub.s32 %s22, 1
        // Predicated region
        $region13: #{tpu_custom_call.1} parent=11 // pred_check
          %p199 = pneg %p95
        $region14: #{tpu_custom_call.1} parent=11 // pred_check_branch
          %201 = sbr.rel (%p199) target = $region16
        $region15: #{tpu_custom_call.1} parent=11 // pred_region
          %203 = vsyncadd [#allocation6], 0
          %s204 = sshll.u32 %s2, 4
          %s205 = int_to_ptr.hbm [resolvable:$true] %s204
          %s206 = sshll.u32 [#allocation7], 4
          %s207 = int_to_ptr.vmem [resolvable:$true] %s206
          %212 = dma.hbm_to_vmem [thread:$0]  %s205, 256, %s207, [#allocation6], 64, 64, 4
        $region16: #{tpu_custom_call.1} parent=11 // pred_fallthru
          _
        // Predicated region
        $region17: #{tpu_custom_call.1} parent=11 // pred_check
          %p213 = pneg %p116
        $region18: #{tpu_custom_call.1} parent=11 // pred_check_branch
          %215 = sbr.rel (%p213) target = $region20
        $region19: #{tpu_custom_call.1} parent=11 // pred_region
          _
        $region20: #{tpu_custom_call.1} parent=11 // pred_fallthru
          _
        // Predicated region
        $region21: #{tpu_custom_call.1} parent=11 // pred_check
          %p216 = pneg %p137
        $region22: #{tpu_custom_call.1} parent=11 // pred_check_branch
          %218 = sbr.rel (%p216) target = $region24
        $region23: #{tpu_custom_call.1} parent=11 // pred_region
          %220 = vsyncadd [#allocation9], 0
          %s221 = sshll.u32 %s4, 4
          %s222 = int_to_ptr.hbm [resolvable:$true] %s221
          %s223 = sshll.u32 [#allocation8], 4
          %s224 = int_to_ptr.vmem [resolvable:$true] %s223
          %229 = dma.hbm_to_vmem [thread:$0]  %s222, 256, %s224, [#allocation9], 64, 64, 4
        $region24: #{tpu_custom_call.1} parent=11 // pred_fallthru
          _
        // Predicated region
        $region25: #{tpu_custom_call.1} parent=11 // pred_check
          %p230 = pneg %p158
        $region26: #{tpu_custom_call.1} parent=11 // pred_check_branch
          %232 = sbr.rel (%p230) target = $region28
        $region27: #{tpu_custom_call.1} parent=11 // pred_region
          _
        $region28: #{tpu_custom_call.1} parent=11 // pred_fallthru
          _
      $region12: #{tpu_custom_call.1} parent=5 // pred_fallthru
        _
      %p233 = scmp.lt.s32.totalorder %s22, 2
      // Predicated region
      $region29: #{tpu_custom_call.1} parent=5 // pred_check
        %p234 = pneg %p233
      $region30: #{tpu_custom_call.1} parent=5 // pred_check_branch
        %236 = sbr.rel (%p234) target = $region32
      $region31: #{tpu_custom_call.1} parent=5 // pred_region
        // Predicated region
        $region33: #{tpu_custom_call.1} parent=31 // pred_check
          %p237 = pneg %p42
        $region34: #{tpu_custom_call.1} parent=31 // pred_check_branch
          %239 = sbr.rel (%p237) target = $region36
        $region35: #{tpu_custom_call.1} parent=31 // pred_region
          %s240 = sand.u32 %s32, 1
          %s241 = scalar_lea.sflag [#allocation3], %s240
          %s242 = sand.u32 %s32, 1
          %s243 = smul.addr %s242, 4
          %s244 = scalar_lea.vmem [#allocation2], %s243
          %246 = vsyncadd %s241, 0
          %s247 = smul.addr %s22, 4
          %s248 = scalar_lea.hbm %s0, %s247
          %s250 = sshll.u32 %s248, 4
          %s251 = int_to_ptr.hbm [resolvable:$true] %s250
          %s252 = sshll.u32 %s244, 4
          %s253 = int_to_ptr.vmem [resolvable:$true] %s252
          %255 = dma.hbm_to_vmem [thread:$0]  %s251, 64, %s253, %s241
        $region36: #{tpu_custom_call.1} parent=31 // pred_fallthru
          _
        // Predicated region
        $region37: #{tpu_custom_call.1} parent=31 // pred_check
          %p256 = pneg %p68
        $region38: #{tpu_custom_call.1} parent=31 // pred_check_branch
          %258 = sbr.rel (%p256) target = $region40
        $region39: #{tpu_custom_call.1} parent=31 // pred_region
          %s259 = sand.u32 %s22, 1
          %s260 = scalar_lea.sflag [#allocation6], %s259
          %s261 = sand.u32 %s58, 1
          %s262 = smul.addr %s261, 8
          %s263 = scalar_lea.vmem [#allocation5], %s262
          %265 = vsyncadd %s260, 0
          %s266 = smul.addr %s22, 8
          %s267 = scalar_lea.hbm %s1, %s266
          %s269 = sshll.u32 %s267, 4
          %s270 = int_to_ptr.hbm [resolvable:$true] %s269
          %s271 = sshll.u32 %s263, 4
          %s272 = int_to_ptr.vmem [resolvable:$true] %s271
          %274 = dma.hbm_to_vmem [thread:$0]  %s270, 128, %s272, %s260
        $region40: #{tpu_custom_call.1} parent=31 // pred_fallthru
          _
      $region32: #{tpu_custom_call.1} parent=5 // pred_fallthru
        _
      %p275 = scmp.le.s32.totalorder 1, %s22
      %p276 = scmp.lt.s32.totalorder %s22, 3
      %p277 = pnand %p275, %p276
      %p278 = pneg %p277
      // Predicated region
      $region41: #{tpu_custom_call.1} parent=5 // pred_check
        _
      $region42: #{tpu_custom_call.1} parent=5 // pred_check_branch
        %280 = sbr.rel (%p277) target = $region44
      $region43: #{tpu_custom_call.1} parent=5 // pred_region
        %s281 = ssub.s32 %s22, 1
        %s282 = sand.u32 %s35, 1
        %s283 = scalar_lea.sflag [#allocation3], %s282
        %s284 = sand.u32 %s35, 1
        %s285 = smul.addr %s284, 4
        %s286 = scalar_lea.vmem [#allocation2], %s285
        // Predicated region
        $region45: #{tpu_custom_call.1} parent=43 // pred_check
          %p287 = pneg %p48
        $region46: #{tpu_custom_call.1} parent=43 // pred_check_branch
          %289 = sbr.rel (%p287) target = $region48
        $region47: #{tpu_custom_call.1} parent=43 // pred_region
          %291 = dma.done %s283, 64
        $region48: #{tpu_custom_call.1} parent=43 // pred_fallthru
          _
        %s292 = sand.u32 %s27, 1
        %s293 = scalar_lea.sflag [#allocation6], %s292
        %s294 = sand.u32 %s61, 1
        %s295 = smul.addr %s294, 8
        %s296 = scalar_lea.vmem [#allocation5], %s295
        // Predicated region
        $region49: #{tpu_custom_call.1} parent=43 // pred_check
          %p297 = pneg %p74
        $region50: #{tpu_custom_call.1} parent=43 // pred_check_branch
          %299 = sbr.rel (%p297) target = $region52
        $region51: #{tpu_custom_call.1} parent=43 // pred_region
          %301 = dma.done %s293, 128
        $region52: #{tpu_custom_call.1} parent=43 // pred_fallthru
          _
        // Predicated region
        $region53: #{tpu_custom_call.1} parent=43 // pred_check
          %p302 = pneg %p95
        $region54: #{tpu_custom_call.1} parent=43 // pred_check_branch
          %304 = sbr.rel (%p302) target = $region56
        $region55: #{tpu_custom_call.1} parent=43 // pred_region
          %306 = dma.done [#allocation6], 256
        $region56: #{tpu_custom_call.1} parent=43 // pred_fallthru
          _
        // Predicated region
        $region57: #{tpu_custom_call.1} parent=43 // pred_check
          %p307 = pneg %p137
        $region58: #{tpu_custom_call.1} parent=43 // pred_check_branch
          %309 = sbr.rel (%p307) target = $region60
        $region59: #{tpu_custom_call.1} parent=43 // pred_region
          %311 = dma.done [#allocation9], 256
        $region60: #{tpu_custom_call.1} parent=43 // pred_fallthru
          _
        %s312 = sand.u32 %s35, 1
        %s313 = scalar_lea.sflag [#allocation3], %s312
        %s314 = sand.u32 %s35, 1
        %s315 = smul.addr %s314, 4
        %s316 = scalar_lea.vmem [#allocation2], %s315
        %p317 = pneg %p48
        %p318 = pneg %p45
        %s319 = sand.u32 %s27, 1
        %s320 = scalar_lea.sflag [#allocation6], %s319
        %s321 = sand.u32 %s61, 1
        %s322 = smul.addr %s321, 8
        %s323 = scalar_lea.vmem [#allocation5], %s322
        %p324 = pneg %p74
        %p325 = pneg %p71
        %p326 = pneg %p95
        %p327 = pneg %p92
        %p328 = pneg %p116
        %p329 = pneg %p113
        %p330 = pneg %p137
        %p331 = pneg %p134
        %p332 = pneg %p158
        %p333 = pneg %p155
        %p334 = pneg %p184
        %p335 = pneg %p181
        %s336 = sand.u32 %s171, 1
        %s337 = scalar_lea.sflag [#allocation4], %s336
        %s338 = sand.u32 %s171, 1
        %s339 = smul.addr %s338, 8
        %s340 = scalar_lea.vmem [#allocation10], %s339
        %v342 = vld [vmem:[%s286] sm:$0xf]
        %v343 = vld [vmem:[#allocation7] sm:$0xf]
        %v344 = vld [vmem:[#allocation7 + $0x4] sm:$0xf]
        %v345 = vld [vmem:[#allocation7 + $0x8] sm:$0xf]
        %v346 = vld [vmem:[#allocation7 + $0xc] sm:$0xf]
        %v347 = vld [vmem:[%s3] sm:$0x1]
        %v349 = vperm.slane %v347, 0
        %v355 = vunpack.c.l.b16 %v343
        %v356 = vunpack.c.l.b16 %v344
        %v357 = vunpack.c.l.b16 %v345
        %v358 = vunpack.c.l.b16 %v346
        %v359 = vpack.c.b16 %v356, %v355
        %v360 = vpack.c.b16 %v358, %v357
        %vm363 = vcmask 261120
        %v365 = vsel %vm363, %v342, 0
        %367 = vmatpush.bf16.msra.mxu0 0
        %368 = vmatpush.bf16.msra.mxu0 0
        %369 = vmatpush.bf16.msra.mxu0 0
        %370 = vmatpush.bf16.msra.mxu0 0
        %371 = vmatpush.bf16.msra.mxu0 0
        %372 = vmatpush.bf16.msra.mxu0 0
        %373 = vmatpush.bf16.msra.mxu0 %v360
        %374 = vmatpush.bf16.msra.mxu0 %v359
        %375 = vmatmul.bf16.gmra.mxu0 %v365
        %v376 = vpop.f32.mrf.mxu0
        %v377 = vadd.f32 %v349, %v376
        %v378 = vpop.f32.mrf.mxu0
        %379 = vdwg.mxu0
        %v380 = vpack.c.bf16 %v377, %v377
        %v381 = vld [vmem:[%s296] sm:$0xff]
        %v382 = vand.u32 2147483647, %v381
        %vm383 = vcmp.le.f32.partialorder %v382, 0.7853982
        %vm384 = vcmp.lt.s32.totalorder %v381, 0
        %v385 = vand.u32 %v381, 2139095040
        %v386 = vshrl.u32 %v385, 23
        %v387 = vsub.s32 %v386, 127
        %v388 = vand.u32 2147483647, %v381
        %v389 = vand.u32 %v388, 8388607
        %v390 = vor.u32 %v389, 8388608
        %v391 = vsub.s32 0, %v390
        %v392 = vadd.s32 %v387, 1
        %vm393 = vcmp.gt.s32.totalorder %v392, 0
        %v394 = vsel %vm393, %v392, 0
        %v395 = vshrl.u32 %v394, 5
        %v396 = vand.u32 %v394, 31
        %v397 = vsub.s32 32, %v396
        %v398 = vshrl.u32 683565275, %v397
        %v399 = vshll.u32 683565275, %v396
        %v400 = vshrl.u32 2475754826, %v397
        %v401 = vor.u32 %v399, %v400
        %v402 = vshll.u32 2475754826, %v396
        %v403 = vshrl.u32 2131351028, %v397
        %v404 = vor.u32 %v402, %v403
        %v405 = vshll.u32 2131351028, %v396
        %v406 = vshrl.u32 2102212464, %v397
        %v407 = vor.u32 %v405, %v406
        %v408 = vshll.u32 2102212464, %v396
        %v409 = vshrl.u32 920167782, %v397
        %v410 = vor.u32 %v408, %v409
        %v411 = vshll.u32 920167782, %v396
        %v412 = vshrl.u32 1326507024, %v397
        %v413 = vor.u32 %v411, %v412
        %vm414 = vcmp.lt.s32.totalorder %v395, 1
        %vm415 = vcmp.lt.s32.totalorder %v395, 2
        %vm416 = vcmp.lt.s32.totalorder %v395, 3
        %vm417 = vcmp.lt.s32.totalorder %v395, 4
        %v418 = vsel %vm414, %v398, %v401
        %v419 = vsel %vm417, %v407, 2102212464
        %v420 = vsel %vm416, %v404, %v419
        %v421 = vsel %vm415, %v418, %v420
        %v422 = vsel %vm414, %v401, %v404
        %v423 = vsel %vm417, %v410, 920167782
        %v424 = vsel %vm416, %v407, %v423
        %v425 = vsel %vm415, %v422, %v424
        %v426 = vsel %vm414, %v404, %v407
        %v427 = vsel %vm417, %v413, 1326507024
        %v428 = vsel %vm416, %v410, %v427
        %v429 = vsel %vm415, %v426, %v428
        %v430 = vshll.u32 %v390, 8
        %v431 = vand.u32 %v430, 65535
        %v432 = vshrl.u32 %v430, 16
        %v433 = vand.u32 %v429, 65535
        %v434 = vshrl.u32 %v429, 16
        %v435 = vmul.u32 %v431, %v433
        %v436 = vmul.u32 %v431, %v434
        %v437 = vmul.u32 %v432, %v433
        %v438 = vmul.u32 %v432, %v434
        %v439 = vshll.u32 %v436, 16
        %v440 = vshrl.u32 %v436, 16
        %v441 = vshll.u32 %v437, 16
        %v442 = vshrl.u32 %v437, 16
        %vm443 = vc.u32 %v435, %v439
        %v444 = vsel %vm443, 1, 0
        %v445 = vadd.s32 %v435, %v439
        %v446 = vadd.s32 %v438, %v444
        %vm447 = vc.u32 %v445, %v441
        %v448 = vsel %vm447, 1, 0
        %v449 = vadd.s32 %v445, %v441
        %v450 = vadd.s32 %v446, %v448
        %v451 = vadd.s32 %v450, %v440
        %v452 = vadd.s32 %v451, %v442
        %v453 = vand.u32 %v430, 65535
        %v454 = vshrl.u32 %v430, 16
        %v455 = vand.u32 %v425, 65535
        %v456 = vshrl.u32 %v425, 16
        %v457 = vmul.u32 %v453, %v455
        %v458 = vmul.u32 %v453, %v456
        %v459 = vmul.u32 %v454, %v455
        %v460 = vmul.u32 %v454, %v456
        %v461 = vshll.u32 %v458, 16
        %v462 = vshrl.u32 %v458, 16
        %v463 = vshll.u32 %v459, 16
        %v464 = vshrl.u32 %v459, 16
        %vm465 = vc.u32 %v457, %v461
        %v466 = vsel %vm465, 1, 0
        %v467 = vadd.s32 %v457, %v461
        %v468 = vadd.s32 %v460, %v466
        %vm469 = vc.u32 %v467, %v463
        %v470 = vsel %vm469, 1, 0
        %v471 = vadd.s32 %v467, %v463
        %v472 = vadd.s32 %v468, %v470
        %v473 = vadd.s32 %v472, %v462
        %v474 = vadd.s32 %v473, %v464
        %v475 = vmul.u32 %v430, %v421
        %v476 = vadd.s32 %v452, %v471
        %vm477 = vc.u32 %v452, %v471
        %v478 = vadd.s32 %v474, 1
        %v479 = vsel %vm477, %v478, %v474
        %v480 = vadd.s32 %v475, %v479
        %v481 = vadd.s32 %v480, 536870912
        %v482 = vshrl.u32 %v481, 30
        %v483 = vshll.u32 %v482, 30
        %v484 = vsub.s32 %v480, %v483
        %vm485 = vcmp.lt.s32.totalorder %v484, 0
        %v486 = vsub.s32 0, %v484
        %v487 = vsel %vm485, %v486, %v484
        %v488 = vclz %v487
        %v489 = vsub.s32 %v488, 2
        %vm490 = vcmp.gt.s32.totalorder 0, %v489
        %v491 = vsel %vm490, 0, %v489
        %v492 = vsub.s32 32, %v491
        %v493 = vshll.u32 %v484, %v491
        %v494 = vshrl.u32 %v476, %v492
        %v495 = vor.u32 %v493, %v494
        %v496 = vsub.s32 4294967266, %v491
        %v497 = vadd.s32 %v496, 127
        %v498 = vshll.u32 %v497, 23
        %v499 = vor.u32 4788187, %v498
        %v500 = vand.u32 2147483647, %v499
        %v502 = vcvt.s32.f32 %v495
        %v503 = vmul.f32 %v502, %v500
        %v504 = vxor.u32 %v503, 2147483648
        %v505 = vsel %vm384, %v504, %v503
        %v506 = vsub.s32 4, %v482
        %v507 = vsel %vm384, %v506, %v482
        %v508 = vsel %vm383, %v381, %v505
        %v509 = vsel %vm383, 0, %v507
        %v510 = vmul.f32 %v508, %v508
        %v511 = vmul.f32 %v510, -0.001358992
        %v512 = vadd.f32 %v511, 0.041655596
        %v513 = vmul.f32 %v510, %v512
        %v514 = vadd.f32 %v513, -0.4999988
        %v515 = vmul.f32 %v510, %v514
        %v516 = vadd.f32 1.0, %v515
        %v517 = vmul.f32 %v508, %v508
        %v518 = vmul.f32 %v517, -0.00019511016
        %v519 = vadd.f32 %v518, 0.008332121
        %v520 = vmul.f32 %v517, %v519
        %v521 = vadd.f32 %v520, -0.16666654
        %v522 = vmul.f32 %v517, %v521
        %v523 = vadd.f32 %v522, 1.0
        %v524 = vmul.f32 %v523, %v508
        %vm525 = vweird.f32 %v381
        %v526 = vand.u32 %v509, 3
        %vm527 = vcmp.lt.s32.totalorder %v526, 2
        %vm528 = vcmp.eq.s32.totalorder %v526, 0
        %v529 = vxor.u32 %v524, 2147483648
        %v530 = vsel %vm528, %v516, %v529
        %vm531 = vcmp.eq.s32.totalorder %v526, 2
        %v532 = vxor.u32 %v516, 2147483648
        %v533 = vsel %vm531, %v532, %v524
        %v534 = vsel %vm527, %v530, %v533
        %v535 = vsel %vm525, nan, %v534
        %v536 = vand.u32 2147483647, %v381
        %vm537 = vcmp.le.f32.partialorder %v536, 0.7853982
        %vm538 = vcmp.lt.s32.totalorder %v381, 0
        %v539 = vand.u32 %v381, 2139095040
        %v540 = vshrl.u32 %v539, 23
        %v541 = vsub.s32 %v540, 127
        %v542 = vand.u32 2147483647, %v381
        %v543 = vand.u32 %v542, 8388607
        %v544 = vor.u32 %v543, 8388608
        %v545 = vsub.s32 0, %v544
        %v546 = vadd.s32 %v541, 1
        %vm547 = vcmp.gt.s32.totalorder %v546, 0
        %v548 = vsel %vm547, %v546, 0
        %v549 = vshrl.u32 %v548, 5
        %v550 = vand.u32 %v548, 31
        %v551 = vsub.s32 32, %v550
        %v552 = vshrl.u32 683565275, %v551
        %v553 = vshll.u32 683565275, %v550
        %v554 = vshrl.u32 2475754826, %v551
        %v555 = vor.u32 %v553, %v554
        %v556 = vshll.u32 2475754826, %v550
        %v557 = vshrl.u32 2131351028, %v551
        %v558 = vor.u32 %v556, %v557
        %v559 = vshll.u32 2131351028, %v550
        %v560 = vshrl.u32 2102212464, %v551
        %v561 = vor.u32 %v559, %v560
        %v562 = vshll.u32 2102212464, %v550
        %v563 = vshrl.u32 920167782, %v551
        %v564 = vor.u32 %v562, %v563
        %v565 = vshll.u32 920167782, %v550
        %v566 = vshrl.u32 1326507024, %v551
        %v567 = vor.u32 %v565, %v566
        %vm568 = vcmp.lt.s32.totalorder %v549, 1
        %vm569 = vcmp.lt.s32.totalorder %v549, 2
        %vm570 = vcmp.lt.s32.totalorder %v549, 3
        %vm571 = vcmp.lt.s32.totalorder %v549, 4
        %v572 = vsel %vm568, %v552, %v555
        %v573 = vsel %vm571, %v561, 2102212464
        %v574 = vsel %vm570, %v558, %v573
        %v575 = vsel %vm569, %v572, %v574
        %v576 = vsel %vm568, %v555, %v558
        %v577 = vsel %vm571, %v564, 920167782
        %v578 = vsel %vm570, %v561, %v577
        %v579 = vsel %vm569, %v576, %v578
        %v580 = vsel %vm568, %v558, %v561
        %v581 = vsel %vm571, %v567, 1326507024
        %v582 = vsel %vm570, %v564, %v581
        %v583 = vsel %vm569, %v580, %v582
        %v584 = vshll.u32 %v544, 8
        %v585 = vand.u32 %v584, 65535
        %v586 = vshrl.u32 %v584, 16
        %v587 = vand.u32 %v583, 65535
        %v588 = vshrl.u32 %v583, 16
        %v589 = vmul.u32 %v585, %v587
        %v590 = vmul.u32 %v585, %v588
        %v591 = vmul.u32 %v586, %v587
        %v592 = vmul.u32 %v586, %v588
        %v593 = vshll.u32 %v590, 16
        %v594 = vshrl.u32 %v590, 16
        %v595 = vshll.u32 %v591, 16
        %v596 = vshrl.u32 %v591, 16
        %vm597 = vc.u32 %v589, %v593
        %v598 = vsel %vm597, 1, 0
        %v599 = vadd.s32 %v589, %v593
        %v600 = vadd.s32 %v592, %v598
        %vm601 = vc.u32 %v599, %v595
        %v602 = vsel %vm601, 1, 0
        %v603 = vadd.s32 %v599, %v595
        %v604 = vadd.s32 %v600, %v602
        %v605 = vadd.s32 %v604, %v594
        %v606 = vadd.s32 %v605, %v596
        %v607 = vand.u32 %v584, 65535
        %v608 = vshrl.u32 %v584, 16
        %v609 = vand.u32 %v579, 65535
        %v610 = vshrl.u32 %v579, 16
        %v611 = vmul.u32 %v607, %v609
        %v612 = vmul.u32 %v607, %v610
        %v613 = vmul.u32 %v608, %v609
        %v614 = vmul.u32 %v608, %v610
        %v615 = vshll.u32 %v612, 16
        %v616 = vshrl.u32 %v612, 16
        %v617 = vshll.u32 %v613, 16
        %v618 = vshrl.u32 %v613, 16
        %vm619 = vc.u32 %v611, %v615
        %v620 = vsel %vm619, 1, 0
        %v621 = vadd.s32 %v611, %v615
        %v622 = vadd.s32 %v614, %v620
        %vm623 = vc.u32 %v621, %v617
        %v624 = vsel %vm623, 1, 0
        %v625 = vadd.s32 %v621, %v617
        %v626 = vadd.s32 %v622, %v624
        %v627 = vadd.s32 %v626, %v616
        %v628 = vadd.s32 %v627, %v618
        %v629 = vmul.u32 %v584, %v575
        %v630 = vadd.s32 %v606, %v625
        %vm631 = vc.u32 %v606, %v625
        %v632 = vadd.s32 %v628, 1
        %v633 = vsel %vm631, %v632, %v628
        %v634 = vadd.s32 %v629, %v633
        %v635 = vadd.s32 %v634, 536870912
        %v636 = vshrl.u32 %v635, 30
        %v637 = vshll.u32 %v636, 30
        %v638 = vsub.s32 %v634, %v637
        %vm639 = vcmp.lt.s32.totalorder %v638, 0
        %v640 = vsub.s32 0, %v638
        %v641 = vsel %vm639, %v640, %v638
        %v642 = vclz %v641
        %v643 = vsub.s32 %v642, 2
        %vm644 = vcmp.gt.s32.totalorder 0, %v643
        %v645 = vsel %vm644, 0, %v643
        %v646 = vsub.s32 32, %v645
        %v647 = vshll.u32 %v638, %v645
        %v648 = vshrl.u32 %v630, %v646
        %v649 = vor.u32 %v647, %v648
        %v650 = vsub.s32 4294967266, %v645
        %v651 = vadd.s32 %v650, 127
        %v652 = vshll.u32 %v651, 23
        %v653 = vor.u32 4788187, %v652
        %v654 = vand.u32 2147483647, %v653
        %v656 = vcvt.s32.f32 %v649
        %v657 = vmul.f32 %v656, %v654
        %v658 = vxor.u32 %v657, 2147483648
        %v659 = vsel %vm538, %v658, %v657
        %v660 = vsub.s32 4, %v636
        %v661 = vsel %vm538, %v660, %v636
        %v662 = vsel %vm537, %v381, %v659
        %v663 = vsel %vm537, 0, %v661
        %v664 = vmul.f32 %v662, %v662
        %v665 = vmul.f32 %v664, -0.001358992
        %v666 = vadd.f32 %v665, 0.041655596
        %v667 = vmul.f32 %v664, %v666
        %v668 = vadd.f32 %v667, -0.4999988
        %v669 = vmul.f32 %v664, %v668
        %v670 = vadd.f32 1.0, %v669
        %v671 = vmul.f32 %v662, %v662
        %v672 = vmul.f32 %v671, -0.00019511016
        %v673 = vadd.f32 %v672, 0.008332121
        %v674 = vmul.f32 %v671, %v673
        %v675 = vadd.f32 %v674, -0.16666654
        %v676 = vmul.f32 %v671, %v675
        %v677 = vadd.f32 %v676, 1.0
        %v678 = vmul.f32 %v677, %v662
        %vm679 = vweird.f32 %v381
        %v680 = vadd.s32 %v663, 3
        %v681 = vand.u32 %v680, 3
        %vm682 = vcmp.lt.s32.totalorder %v681, 2
        %vm683 = vcmp.eq.s32.totalorder %v681, 0
        %v684 = vxor.u32 %v678, 2147483648
        %v685 = vsel %vm683, %v670, %v684
        %vm686 = vcmp.eq.s32.totalorder %v681, 2
        %v687 = vxor.u32 %v670, 2147483648
        %v688 = vsel %vm686, %v687, %v678
        %v689 = vsel %vm682, %v685, %v688
        %v690 = vsel %vm679, nan, %v689
        %v691 = vmul.f32 %v377, %v535
        %693 = vrot.lane.b32.xlu0 %v690, 16
        %v694 = vpop.permute.xlu0 %693
        %v696 = vmul.f32 %v377, %v694
        %698 = vrot.lane.b32.xlu0 %v696, 112
        %v699 = vpop.permute.xlu0 %698
        %v701 = vsub.f32 %v691, %v699
        %703 = vrot.lane.b32.xlu0 %v535, 16
        %v704 = vpop.permute.xlu0 %703
        %v706 = vmul.f32 %v377, %v704
        %v707 = vmul.f32 %v377, %v690
        %709 = vrot.lane.b32.xlu0 %v707, 16
        %v710 = vpop.permute.xlu0 %709
        %v712 = vadd.f32 %v706, %v710
        %713 = vrot.lane.b32.xlu0 %v535, 32
        %v714 = vpop.permute.xlu0 %713
        %v716 = vmul.f32 %v377, %v714
        %717 = vrot.lane.b32.xlu0 %v690, 48
        %v718 = vpop.permute.xlu0 %717
        %v720 = vmul.f32 %v377, %v718
        %722 = vrot.lane.b32.xlu0 %v720, 112
        %v723 = vpop.permute.xlu0 %722
        %v725 = vsub.f32 %v716, %v723
        %726 = vrot.lane.b32.xlu0 %v535, 48
        %v727 = vpop.permute.xlu0 %726
        %v729 = vmul.f32 %v377, %v727
        %730 = vrot.lane.b32.xlu0 %v690, 32
        %v731 = vpop.permute.xlu0 %730
        %v733 = vmul.f32 %v377, %v731
        %735 = vrot.lane.b32.xlu0 %v733, 16
        %v736 = vpop.permute.xlu0 %735
        %v738 = vadd.f32 %v729, %v736
        %740 = vrot.lane.b32.xlu0 %v712, 116
        %v741 = vpop.permute.xlu0 %740
        %vm743 = vcmask 31744
        %v744 = vsel %vm743, %v701, %v741
        %v745 = vpack.c.bf16 %v744, %v744
        %747 = vrot.lane.b32.xlu0 %v725, 96
        %v748 = vpop.permute.xlu0 %747
        %751 = vrot.lane.b32.xlu0 %v738, 84
        %v752 = vpop.permute.xlu0 %751
        %v754 = vsel %vm743, %v748, %v752
        %v755 = vpack.c.bf16 %v754, %v754
        %vm756 = vcmask 64512
        %v758 = vsel %vm756, %v745, 0
        %v761 = vsel %vm756, %v755, 0
        %763 = vmatpush.bf16.xpose.msra.mxu0 0
        %764 = vmatpush.bf16.xpose.msra.mxu0 0
        %765 = vmatpush.bf16.xpose.msra.mxu0 0
        %766 = vmatpush.bf16.xpose.msra.mxu0 0
        %767 = vmatpush.bf16.xpose.msra.mxu0 0
        %768 = vmatpush.bf16.xpose.msra.mxu0 0
        %769 = vmatpush.bf16.xpose.msra.mxu0 0
        %770 = vmatpush.bf16.xpose.msra.mxu0 %v761
        %771 = vmatmul.bf16.gmra.mxu0 %v758
        %v772 = vpop.f32.mrf.mxu0
        %v773 = vadd.f32 0.0, %v772
        %v774 = vpop.f32.mrf.mxu0
        %775 = vdwg.mxu0
        %v776 = vsel %vm756, %v773, -inf
        %777 = vmax.xlane.f32.xlu0 %v776
        %v778 = vpop.xlane.xlu0 %777
        %v779 = vsub.f32 %v773, %v778
        %v780 = vmul.f32 %v779, 1.442695
        %v781 = vpow.pop %v780
        %v782 = vsel %vm756, %v781, 0.0
        %783 = vadd.xlane.f32.xlu0 %v782
        %v784 = vpop.xlane.xlu0 %783
        %v785 = vrcp.pop %v784
        %v786 = vmul.f32 %v781, %v785
        %v787 = vpack.c.bf16 %v786, %v786
        %v789 = vunpack.c.l.b16 %v380
        %v790 = vpack.c.b16 %v789, %v789
        %791 = vrot.lane.b32.xlu0 %v790, 64
        %v792 = vpop.permute.xlu0 %791
        %v794 = vsel %vm756, %v787, 0
        %vm796 = vcmask 1043456
        %v798 = vsel %vm796, %v792, 0
        %800 = vmatpush.bf16.msra.mxu0 0
        %801 = vmatpush.bf16.msra.mxu0 0
        %802 = vmatpush.bf16.msra.mxu0 0
        %803 = vmatpush.bf16.msra.mxu0 0
        %804 = vmatpush.bf16.msra.mxu0 0
        %805 = vmatpush.bf16.msra.mxu0 0
        %806 = vmatpush.bf16.msra.mxu0 0
        %807 = vmatpush.bf16.msra.mxu0 %v798
        %808 = vmatmul.bf16.gmra.mxu0 %v794
        %v809 = vpop.f32.mrf.mxu0
        %v810 = vadd.f32 0.0, %v809
        %v811 = vpop.f32.mrf.mxu0
        %812 = vdwg.mxu0
        %v813 = vpack.c.bf16 %v810, %v810
        %v814 = vld [vmem:[#allocation8] sm:$0xf]
        %816 = vrot.lane.b32.xlu0 %v701, 124
        %v817 = vpop.permute.xlu0 %816
        %819 = vrot.lane.b32.xlu0 %v712, 112
        %v820 = vpop.permute.xlu0 %819
        %v822 = vsel %vm743, %v817, %v820
        %v823 = vpack.c.bf16 %v822, %v822
        %824 = vrot.lane.b32.xlu0 %v725, 92
        %v825 = vpop.permute.xlu0 %824
        %827 = vrot.lane.b32.xlu0 %v738, 80
        %v828 = vpop.permute.xlu0 %827
        %v830 = vsel %vm743, %v825, %v828
        %v831 = vpack.c.bf16 %v830, %v830
        %v833 = vsel %vm756, %v823, 0
        %v836 = vsel %vm756, %v831, 0
        %838 = vmatpush.bf16.xpose.msra.mxu0 0
        %839 = vmatpush.bf16.xpose.msra.mxu0 0
        %840 = vmatpush.bf16.xpose.msra.mxu0 0
        %841 = vmatpush.bf16.xpose.msra.mxu0 0
        %842 = vmatpush.bf16.xpose.msra.mxu0 0
        %843 = vmatpush.bf16.xpose.msra.mxu0 0
        %844 = vmatpush.bf16.xpose.msra.mxu0 0
        %845 = vmatpush.bf16.xpose.msra.mxu0 %v836
        %846 = vmatmul.bf16.gmra.mxu0 %v833
        %v847 = vpop.f32.mrf.mxu0
        %v848 = vadd.f32 0.0, %v847
        %v849 = vpop.f32.mrf.mxu0
        %850 = vdwg.mxu0
        %v851 = vsel %vm756, %v848, -inf
        %852 = vmax.xlane.f32.xlu0 %v851
        %v853 = vpop.xlane.xlu0 %852
        %v854 = vsub.f32 %v848, %v853
        %v855 = vmul.f32 %v854, 1.442695
        %v856 = vpow.pop %v855
        %v857 = vsel %vm756, %v856, 0.0
        %858 = vadd.xlane.f32.xlu0 %v857
        %v859 = vpop.xlane.xlu0 %858
        %v860 = vrcp.pop %v859
        %v861 = vmul.f32 %v856, %v860
        %v862 = vpack.c.bf16 %v861, %v861
        %863 = vrot.lane.b32.xlu0 %v790, 56
        %v864 = vpop.permute.xlu0 %863
        %v866 = vsel %vm756, %v862, 0
        %v869 = vsel %vm796, %v864, 0
        %871 = vmatpush.bf16.msra.mxu0 0
        %872 = vmatpush.bf16.msra.mxu0 0
        %873 = vmatpush.bf16.msra.mxu0 0
        %874 = vmatpush.bf16.msra.mxu0 0
        %875 = vmatpush.bf16.msra.mxu0 0
        %876 = vmatpush.bf16.msra.mxu0 0
        %877 = vmatpush.bf16.msra.mxu0 0
        %878 = vmatpush.bf16.msra.mxu0 %v869
        %879 = vmatmul.bf16.gmra.mxu0 %v866
        %v880 = vpop.f32.mrf.mxu0
        %v881 = vadd.f32 0.0, %v880
        %v882 = vpop.f32.mrf.mxu0
        %883 = vdwg.mxu0
        %v884 = vpack.c.bf16 %v881, %v881
        %s885 = scalar_lea.vmem [#allocation8], 4
        %v886 = vld [vmem:[%s885] sm:$0xf]
        %v888 = vsel %vm756, %v884, 0
        %v891 = vsel %vm796, %v886, 0
        %893 = vmatpush.bf16.msra.mxu0 0
        %894 = vmatpush.bf16.msra.mxu0 0
        %895 = vmatpush.bf16.msra.mxu0 0
        %896 = vmatpush.bf16.msra.mxu0 0
        %897 = vmatpush.bf16.msra.mxu0 0
        %898 = vmatpush.bf16.msra.mxu0 0
        %899 = vmatpush.bf16.msra.mxu0 0
        %900 = vmatpush.bf16.msra.mxu0 %v891
        %901 = vmatmul.bf16.gmra.mxu0 %v888
        %v902 = vpop.f32.mrf.mxu0
        %v903 = vadd.f32 0.0, %v902
        %v904 = vpop.f32.mrf.mxu0
        %905 = vdwg.mxu0
        %v907 = vsel %vm756, %v813, 0
        %v910 = vsel %vm796, %v814, 0
        %912 = vmatpush.bf16.msra.mxu0 0
        %913 = vmatpush.bf16.msra.mxu0 0
        %914 = vmatpush.bf16.msra.mxu0 0
        %915 = vmatpush.bf16.msra.mxu0 0
        %916 = vmatpush.bf16.msra.mxu0 0
        %917 = vmatpush.bf16.msra.mxu0 0
        %918 = vmatpush.bf16.msra.mxu0 0
        %919 = vmatpush.bf16.msra.mxu0 %v910
        %920 = vmatmul.bf16.gmra.mxu0 %v907
        %v921 = vpop.f32.mrf.mxu0
        %v922 = vadd.f32 %v903, %v921
        %v923 = vpop.f32.mrf.mxu0
        %924 = vdwg.mxu0
        %925 = vrot.lane.b32.xlu0 %v701, 120
        %v926 = vpop.permute.xlu0 %925
        %928 = vrot.lane.b32.xlu0 %v712, 108
        %v929 = vpop.permute.xlu0 %928
        %v931 = vsel %vm743, %v926, %v929
        %v932 = vpack.c.bf16 %v931, %v931
        %933 = vrot.lane.b32.xlu0 %v725, 88
        %v934 = vpop.permute.xlu0 %933
        %936 = vrot.lane.b32.xlu0 %v738, 76
        %v937 = vpop.permute.xlu0 %936
        %v939 = vsel %vm743, %v934, %v937
        %v940 = vpack.c.bf16 %v939, %v939
        %v942 = vsel %vm756, %v932, 0
        %v945 = vsel %vm756, %v940, 0
        %947 = vmatpush.bf16.xpose.msra.mxu0 0
        %948 = vmatpush.bf16.xpose.msra.mxu0 0
        %949 = vmatpush.bf16.xpose.msra.mxu0 0
        %950 = vmatpush.bf16.xpose.msra.mxu0 0
        %951 = vmatpush.bf16.xpose.msra.mxu0 0
        %952 = vmatpush.bf16.xpose.msra.mxu0 0
        %953 = vmatpush.bf16.xpose.msra.mxu0 0
        %954 = vmatpush.bf16.xpose.msra.mxu0 %v945
        %955 = vmatmul.bf16.gmra.mxu0 %v942
        %v956 = vpop.f32.mrf.mxu0
        %v957 = vadd.f32 0.0, %v956
        %v958 = vpop.f32.mrf.mxu0
        %959 = vdwg.mxu0
        %v960 = vsel %vm756, %v957, -inf
        %961 = vmax.xlane.f32.xlu0 %v960
        %v962 = vpop.xlane.xlu0 %961
        %v963 = vsub.f32 %v957, %v962
        %v964 = vmul.f32 %v963, 1.442695
        %v965 = vpow.pop %v964
        %v966 = vsel %vm756, %v965, 0.0
        %967 = vadd.xlane.f32.xlu0 %v966
        %v968 = vpop.xlane.xlu0 %967
        %v969 = vrcp.pop %v968
        %v970 = vmul.f32 %v965, %v969
        %v971 = vpack.c.bf16 %v970, %v970
        %972 = vrot.lane.b32.xlu0 %v790, 48
        %v973 = vpop.permute.xlu0 %972
        %v975 = vsel %vm756, %v971, 0
        %v978 = vsel %vm796, %v973, 0
        %980 = vmatpush.bf16.msra.mxu0 0
        %981 = vmatpush.bf16.msra.mxu0 0
        %982 = vmatpush.bf16.msra.mxu0 0
        %983 = vmatpush.bf16.msra.mxu0 0
        %984 = vmatpush.bf16.msra.mxu0 0
        %985 = vmatpush.bf16.msra.mxu0 0
        %986 = vmatpush.bf16.msra.mxu0 0
        %987 = vmatpush.bf16.msra.mxu0 %v978
        %988 = vmatmul.bf16.gmra.mxu0 %v975
        %v989 = vpop.f32.mrf.mxu0
        %v990 = vadd.f32 0.0, %v989
        %v991 = vpop.f32.mrf.mxu0
        %992 = vdwg.mxu0
        %v993 = vpack.c.bf16 %v990, %v990
        %s994 = scalar_lea.vmem [#allocation8], 8
        %v995 = vld [vmem:[%s994] sm:$0xf]
        %v997 = vsel %vm756, %v993, 0
        %v1000 = vsel %vm796, %v995, 0
        %1002 = vmatpush.bf16.msra.mxu0 0
        %1003 = vmatpush.bf16.msra.mxu0 0
        %1004 = vmatpush.bf16.msra.mxu0 0
        %1005 = vmatpush.bf16.msra.mxu0 0
        %1006 = vmatpush.bf16.msra.mxu0 0
        %1007 = vmatpush.bf16.msra.mxu0 0
        %1008 = vmatpush.bf16.msra.mxu0 0
        %1009 = vmatpush.bf16.msra.mxu0 %v1000
        %1010 = vmatmul.bf16.gmra.mxu0 %v997
        %v1011 = vpop.f32.mrf.mxu0
        %v1012 = vadd.f32 0.0, %v1011
        %v1013 = vpop.f32.mrf.mxu0
        %1014 = vdwg.mxu0
        %v1015 = vadd.f32 %v922, %v1012
        %1016 = vrot.lane.b32.xlu0 %v701, 116
        %v1017 = vpop.permute.xlu0 %1016
        %1019 = vrot.lane.b32.xlu0 %v712, 104
        %v1020 = vpop.permute.xlu0 %1019
        %v1022 = vsel %vm743, %v1017, %v1020
        %v1023 = vpack.c.bf16 %v1022, %v1022
        %1024 = vrot.lane.b32.xlu0 %v725, 84
        %v1025 = vpop.permute.xlu0 %1024
        %1027 = vrot.lane.b32.xlu0 %v738, 72
        %v1028 = vpop.permute.xlu0 %1027
        %v1030 = vsel %vm743, %v1025, %v1028
        %v1031 = vpack.c.bf16 %v1030, %v1030
        %v1033 = vsel %vm756, %v1023, 0
        %v1036 = vsel %vm756, %v1031, 0
        %1038 = vmatpush.bf16.xpose.msra.mxu0 0
        %1039 = vmatpush.bf16.xpose.msra.mxu0 0
        %1040 = vmatpush.bf16.xpose.msra.mxu0 0
        %1041 = vmatpush.bf16.xpose.msra.mxu0 0
        %1042 = vmatpush.bf16.xpose.msra.mxu0 0
        %1043 = vmatpush.bf16.xpose.msra.mxu0 0
        %1044 = vmatpush.bf16.xpose.msra.mxu0 0
        %1045 = vmatpush.bf16.xpose.msra.mxu0 %v1036
        %1046 = vmatmul.bf16.gmra.mxu0 %v1033
        %v1047 = vpop.f32.mrf.mxu0
        %v1048 = vadd.f32 0.0, %v1047
        %v1049 = vpop.f32.mrf.mxu0
        %1050 = vdwg.mxu0
        %v1051 = vsel %vm756, %v1048, -inf
        %1052 = vmax.xlane.f32.xlu0 %v1051
        %v1053 = vpop.xlane.xlu0 %1052
        %v1054 = vsub.f32 %v1048, %v1053
        %v1055 = vmul.f32 %v1054, 1.442695
        %v1056 = vpow.pop %v1055
        %v1057 = vsel %vm756, %v1056, 0.0
        %1058 = vadd.xlane.f32.xlu0 %v1057
        %v1059 = vpop.xlane.xlu0 %1058
        %v1060 = vrcp.pop %v1059
        %v1061 = vmul.f32 %v1056, %v1060
        %v1062 = vpack.c.bf16 %v1061, %v1061
        %1063 = vrot.lane.b32.xlu0 %v790, 40
        %v1064 = vpop.permute.xlu0 %1063
        %v1066 = vsel %vm756, %v1062, 0
        %v1069 = vsel %vm796, %v1064, 0
        %1071 = vmatpush.bf16.msra.mxu0 0
        %1072 = vmatpush.bf16.msra.mxu0 0
        %1073 = vmatpush.bf16.msra.mxu0 0
        %1074 = vmatpush.bf16.msra.mxu0 0
        %1075 = vmatpush.bf16.msra.mxu0 0
        %1076 = vmatpush.bf16.msra.mxu0 0
        %1077 = vmatpush.bf16.msra.mxu0 0
        %1078 = vmatpush.bf16.msra.mxu0 %v1069
        %1079 = vmatmul.bf16.gmra.mxu0 %v1066
        %v1080 = vpop.f32.mrf.mxu0
        %v1081 = vadd.f32 0.0, %v1080
        %v1082 = vpop.f32.mrf.mxu0
        %1083 = vdwg.mxu0
        %v1084 = vpack.c.bf16 %v1081, %v1081
        %s1085 = scalar_lea.vmem [#allocation8], 12
        %v1086 = vld [vmem:[%s1085] sm:$0xf]
        %v1088 = vsel %vm756, %v1084, 0
        %v1091 = vsel %vm796, %v1086, 0
        %1093 = vmatpush.bf16.msra.mxu0 0
        %1094 = vmatpush.bf16.msra.mxu0 0
        %1095 = vmatpush.bf16.msra.mxu0 0
        %1096 = vmatpush.bf16.msra.mxu0 0
        %1097 = vmatpush.bf16.msra.mxu0 0
        %1098 = vmatpush.bf16.msra.mxu0 0
        %1099 = vmatpush.bf16.msra.mxu0 0
        %1100 = vmatpush.bf16.msra.mxu0 %v1091
        %1101 = vmatmul.bf16.gmra.mxu0 %v1088
        %v1102 = vpop.f32.mrf.mxu0
        %v1103 = vadd.f32 0.0, %v1102
        %v1104 = vpop.f32.mrf.mxu0
        %1105 = vdwg.mxu0
        %v1106 = vadd.f32 %v1015, %v1103
        %v1107 = vld [vmem:[%s5] sm:$0x1]
        %v1109 = vperm.slane %v1107, 0
        %v1111 = vadd.f32 %v1106, %v1109
        %1112 = vst.msk [vmem:[%s340] sm:$0xff] %vm363, %v1111
        %s1113 = sand.u32 %s171, 1
        %s1114 = scalar_lea.sflag [#allocation4], %s1113
        %s1115 = sand.u32 %s171, 1
        %s1116 = smul.addr %s1115, 8
        %s1117 = scalar_lea.vmem [#allocation10], %s1116
        // Predicated region
        $region61: #{tpu_custom_call.1} parent=43 // pred_check
          %p1118 = pneg %p181
        $region62: #{tpu_custom_call.1} parent=43 // pred_check_branch
          %1120 = sbr.rel (%p1118) target = $region64
        $region63: #{tpu_custom_call.1} parent=43 // pred_region
          %1122 = vsyncadd %s1114, 0
          %s1123 = smul.addr %s27, 8
          %s1124 = scalar_lea.hbm %s6, %s1123
          %s1126 = sshll.u32 %s1117, 4
          %s1127 = int_to_ptr.vmem [resolvable:$true] %s1126
          %s1128 = sshll.u32 %s1124, 4
          %s1129 = int_to_ptr.hbm [resolvable:$true] %s1128
          %1131 = dma.vmem_to_hbm [thread:$0]  %s1127, 128, %s1129, %s1114
        $region64: #{tpu_custom_call.1} parent=43 // pred_fallthru
          _
      $region44: #{tpu_custom_call.1} parent=5 // pred_fallthru
        _
      %p1132 = scmp.le.s32.totalorder 2, %s22
      // Predicated region
      $region65: #{tpu_custom_call.1} parent=5 // pred_check
        %p1133 = pneg %p1132
      $region66: #{tpu_custom_call.1} parent=5 // pred_check_branch
        %1135 = sbr.rel (%p1133) target = $region68
      $region67: #{tpu_custom_call.1} parent=5 // pred_region
        %s1136 = ssub.s32 %s22, 2
        // Predicated region
        $region69: #{tpu_custom_call.1} parent=67 // pred_check
          %p1137 = pneg %p187
        $region70: #{tpu_custom_call.1} parent=67 // pred_check_branch
          %1139 = sbr.rel (%p1137) target = $region72
        $region71: #{tpu_custom_call.1} parent=67 // pred_region
          %s1140 = sand.u32 %s172, 1
          %s1141 = scalar_lea.sflag [#allocation4], %s1140
          %s1142 = sand.u32 %s172, 1
          %s1143 = smul.addr %s1142, 8
          %s1144 = scalar_lea.vmem [#allocation10], %s1143
          %1146 = dma.done %s1141, 128
        $region72: #{tpu_custom_call.1} parent=67 // pred_fallthru
          _
      $region68: #{tpu_custom_call.1} parent=5 // pred_fallthru
        _
    $region6: #{tpu_custom_call.1} parent=1 // loop_footer
      %s26 = sadd.s32 1, %s22
    $region7: #{tpu_custom_call.1} parent=1 // loop_footer_branch
      %21 = sbr.rel target = $region3
    $region8: #{tpu_custom_call.1} parent=1 // loop_exit
      _
    %1147 = vsyncpa [#allocation3], 1
    %s1148 = scalar_lea.sflag [#allocation3], 1
    %1149 = vsyncpa %s1148, 1
    %1150 = vsyncpa [#allocation6], 1
    %s1151 = scalar_lea.sflag [#allocation6], 1
    %1152 = vsyncpa %s1151, 1
    %1153 = vsyncpa [#allocation9], 1
    %1154 = vsyncpa [#allocation4], 1
    %s1155 = scalar_lea.sflag [#allocation4], 1
    %1156 = vsyncpa %s1155, 1

</llo_original>
